<compile_context>
chip_gen: v6e
topology: v6e:2x2x1
jax: 0.10.0
libtpu: 0.0.40
codegen_flags: <defaults>
</compile_context>

<pallas_src>
import math
from functools import partial

import jax
import jax.numpy as jnp
import numpy as np
from jax.experimental import pallas as pl
from jax.experimental.pallas import tpu as pltpu


# ----------------------------------------------------------------------------
# Fused QKV projection kernel: one row-tile of query/key/value in, one
# lane-dense (tm, 3*d_model) tile out.
# ----------------------------------------------------------------------------
def _qkv_proj_kernel(xq_ref, xk_ref, xv_ref, wq_ref, wk_ref, wv_ref, b_ref,
                     o_ref, *, mxu_dtype):
    cast = lambda a: a.astype(mxu_dtype)
    oq = jnp.dot(cast(xq_ref[...]), cast(wq_ref[...]),
                 preferred_element_type=jnp.float32)
    ok = jnp.dot(cast(xk_ref[...]), cast(wk_ref[...]),
                 preferred_element_type=jnp.float32)
    ov = jnp.dot(cast(xv_ref[...]), cast(wv_ref[...]),
                 preferred_element_type=jnp.float32)
    o_ref[...] = jnp.concatenate([oq, ok, ov], axis=-1) + b_ref[...]


def qkv_project_pallas(xq, xk, xv, wq_t, wk_t, wv_t, b_qkv, *,
                       row_tile=512, mxu_dtype=jnp.float32):
    """xq/xk/xv: (N, D); w*_t: (D, D) pre-transposed; b_qkv: (1, 3*D)."""
    n, d = xq.shape
    tm = min(row_tile, n)
    x_spec = pl.BlockSpec((tm, d), lambda i: (i, 0))
    w_spec = pl.BlockSpec((d, d), lambda i: (0, 0))       # resident across tiles
    b_spec = pl.BlockSpec((1, 3 * d), lambda i: (0, 0))
    return pl.pallas_call(
        partial(_qkv_proj_kernel, mxu_dtype=mxu_dtype),
        out_shape=jax.ShapeDtypeStruct((n, 3 * d), jnp.float32),
        grid=(pl.cdiv(n, tm),),
        in_specs=[x_spec, x_spec, x_spec, w_spec, w_spec, w_spec, b_spec],
        out_specs=pl.BlockSpec((tm, 3 * d), lambda i: (i, 0)),
        compiler_params=pltpu.CompilerParams(dimension_semantics=("parallel",)),
    )(xq, xk, xv, wq_t, wk_t, wv_t, b_qkv)


# ----------------------------------------------------------------------------
# Plain tiled linear kernel:  y = x @ W^T + b   (W passed pre-transposed)
# ----------------------------------------------------------------------------
def _linear_kernel(x_ref, w_ref, b_ref, o_ref, *, mxu_dtype):
    o_ref[...] = jnp.dot(x_ref[...].astype(mxu_dtype),
                         w_ref[...].astype(mxu_dtype),
                         preferred_element_type=jnp.float32) + b_ref[...]


def linear_pallas(x2d, w_t, b2, *, row_tile=512, mxu_dtype=jnp.float32):
    """x2d: (N, Din); w_t: (Din, Dout) pre-transposed; b2: (1, Dout)."""
    n, din = x2d.shape
    dout = w_t.shape[1]
    tm = min(row_tile, n)
    return pl.pallas_call(
        partial(_linear_kernel, mxu_dtype=mxu_dtype),
        out_shape=jax.ShapeDtypeStruct((n, dout), jnp.float32),
        grid=(pl.cdiv(n, tm),),
        in_specs=[pl.BlockSpec((tm, din), lambda i: (i, 0)),
                  pl.BlockSpec((din, dout), lambda i: (0, 0)),
                  pl.BlockSpec((1, dout), lambda i: (0, 0))],
        out_specs=pl.BlockSpec((tm, dout), lambda i: (i, 0)),
        compiler_params=pltpu.CompilerParams(dimension_semantics=("parallel",)),
    )(x2d, w_t, b2)


# ----------------------------------------------------------------------------
# Attention kernel: one batch per grid step, all heads processed in-kernel.
#   scores = QK^T / sqrt(d_k), scaled elementwise by the banded Gaussian mask
#   M[i,j] = exp(-(i-j)^2/2)/sqrt(2*pi) for |i-j|<=maskn and i,j < ks(batch),
#   else 0 -> softmax(dim=-1) -> P @ V.  Output is one lane-dense (S, d_model)
#   store per step.
# ----------------------------------------------------------------------------
def _attention_kernel(ks_ref, qkv_ref, o_ref, *, h, d_k, maskn, inv_sqrt_dk,
                      mxu_dtype):
    b = pl.program_id(0)
    ks = ks_ref[b]                                   # per-batch valid length
    d_model = h * d_k
    qkv = qkv_ref[...]                               # (S, 3*d_model)
    s = qkv.shape[0]

    # Analytical banded Gaussian mask, shared across heads.  exp() runs on the
    # EUP slot; replaces the old 2*maskn+1-term VALU select/add loop.
    row = jax.lax.broadcasted_iota(jnp.int32, (s, s), 0)
    col = jax.lax.broadcasted_iota(jnp.int32, (s, s), 1)
    diff = row - col
    inside = (row < ks) & (col < ks) & (jnp.abs(diff) <= maskn)
    diff_f = diff.astype(jnp.float32)
    gauss = jnp.exp(diff_f * diff_f * -0.5) * (1.0 / math.sqrt(2.0 * math.pi))
    m_gauss = jnp.where(inside, gauss, 0.0)

    outs = []
    for hh in range(h):                              # static unroll over heads
        lo = hh * d_k
        q_h = qkv[:, lo:lo + d_k].astype(mxu_dtype)
        k_h = qkv[:, d_model + lo:d_model + lo + d_k].astype(mxu_dtype)
        v_h = qkv[:, 2 * d_model + lo:2 * d_model + lo + d_k].astype(mxu_dtype)

        scores = jax.lax.dot_general(
            q_h, k_h, (((1,), (1,)), ((), ())),
            preferred_element_type=jnp.float32) * inv_sqrt_dk   # (S, S)
        scores = scores * m_gauss

        mx = jnp.max(scores, axis=-1, keepdims=True)
        e = jnp.exp(scores - mx)
        p = e * pl.reciprocal(jnp.sum(e, axis=-1, keepdims=True), approx=True)
        # TODO(synk): nn.Dropout(p=0.1) on p_attn omitted (inference/identity).
        outs.append(jnp.dot(p.astype(mxu_dtype), v_h,
                            preferred_element_type=jnp.float32))

    # Single lane-dense store covering all heads (last dim = d_model).
    o_ref[...] = jnp.concatenate(outs, axis=-1).astype(o_ref.dtype)


def attention_pallas(qkv, ks, *, h, d_k, maskn, mxu_dtype=jnp.float32):
    """qkv: (B, S, 3*d_model) f32 (Q|K|V along lanes); ks: (B,) int32."""
    B, S, three_d = qkv.shape
    d_model = h * d_k
    kern = partial(_attention_kernel, h=h, d_k=d_k, maskn=maskn,
                   inv_sqrt_dk=1.0 / math.sqrt(d_k), mxu_dtype=mxu_dtype)
    return pl.pallas_call(
        kern,
        out_shape=jax.ShapeDtypeStruct((B, S, d_model), jnp.float32),
        grid=(B,),
        in_specs=[
            pl.BlockSpec(memory_space=pltpu.MemorySpace.SMEM),   # ks
            pl.BlockSpec((pl.Squeezed(), S, three_d), lambda b: (b, 0, 0)),
        ],
        out_specs=pl.BlockSpec((pl.Squeezed(), S, d_model), lambda b: (b, 0, 0)),
        compiler_params=pltpu.CompilerParams(dimension_semantics=("parallel",)),
    )(ks, qkv)


# ----------------------------------------------------------------------------
# Module wrapper (parameter setup + cheap reshapes are plain JAX glue;
# no transposes of activations between kernels)
# ----------------------------------------------------------------------------
class MultiHeadedAttentionPallas:
    def __init__(self, h, d_model, Ln, key, mxu_dtype=jnp.float32):
        assert d_model % h == 0
        self.h = h
        self.d_k = d_model // h
        self.d_model = d_model
        self.maskn = Ln // 2
        self.mxu_dtype = mxu_dtype   # set to jnp.bfloat16 on v6e/v7x for speed
        # L kept only for the reference check; the kernel rebuilds it as
        # exp(-d^2/2)/sqrt(2*pi) analytically.
        self.L = jnp.asarray(
            [np.exp(-x ** 2 / 2) / math.sqrt(2 * math.pi)
             for x in range(-(Ln // 2), Ln // 2 + 1, 1)], jnp.float32)
        bound = 1.0 / math.sqrt(d_model)     # mimic torch Linear default init
        self.ws, self.bs = [], []
        for _ in range(4):
            key, k1, k2 = jax.random.split(key, 3)
            self.ws.append(jax.random.uniform(
                k1, (d_model, d_model), jnp.float32, -bound, bound))
            self.bs.append(jax.random.uniform(
                k2, (d_model,), jnp.float32, -bound, bound))
        # Pre-transpose / pre-pack weights ONCE (no per-forward .T).
        self.wq_t = self.ws[0].T
        self.wk_t = self.ws[1].T
        self.wv_t = self.ws[2].T
        self.b_qkv = jnp.concatenate(self.bs[:3]).reshape(1, 3 * d_model)
        self.wo_t = self.ws[3].T
        self.b_o = self.bs[3].reshape(1, d_model)

    def __call__(self, query, key, value, mask):
        B, S, D = query.shape
        n = B * S

        # Fused QKV projection: one pallas_call, lane-dense (N, 3*D) output.
        qkv = qkv_project_pallas(
            query.reshape(n, D), key.reshape(n, D), value.reshape(n, D),
            self.wq_t, self.wk_t, self.wv_t, self.b_qkv,
            mxu_dtype=self.mxu_dtype)
        qkv = qkv.reshape(B, S, 3 * D)

        # mask (B,1,S) -> unsqueeze(1) -> (B,1,1,S); ks[b] = mask.sum(-1).max(-1)
        ks = jnp.max(jnp.sum(mask.astype(jnp.int32), axis=-1),
                     axis=-1).astype(jnp.int32)          # (B,)

        x = attention_pallas(qkv, ks, h=self.h, d_k=self.d_k,
                             maskn=self.maskn,
                             mxu_dtype=self.mxu_dtype)   # (B, S, d_model)

        out = linear_pallas(x.reshape(n, D), self.wo_t, self.b_o,
                            mxu_dtype=self.mxu_dtype)
        return out.reshape(B, S, D)


# ----------------------------------------------------------------------------
# Pure-numpy reference mirroring the PyTorch code (for correctness check)
# ----------------------------------------------------------------------------
def reference_forward(q_in, k_in, v_in, mask, mha):
    def lin(x, w, b):
        return x @ np.asarray(w).T + np.asarray(b)

    B, S, D = q_in.shape
    h, d_k = mha.h, mha.d_k

    def proj(x, w, b):
        return lin(x, w, b).reshape(B, S, h, d_k).transpose(0, 2, 1, 3)

    q = proj(q_in, mha.ws[0], mha.bs[0])
    k = proj(k_in, mha.ws[1], mha.bs[1])
    v = proj(v_in, mha.ws[2], mha.bs[2])

    scores = q @ k.transpose(0, 1, 3, 2) / math.sqrt(d_k)
    L = np.asarray(mha.L)
    maskn = L.shape[0] // 2
    mask4 = mask[:, None]                      # unsqueeze(1): (B,1,1,S)
    input_len = mask4.sum(-1).max(-1)          # (B,1)
    M = np.zeros_like(scores)
    for bn in range(B):
        ks = int(input_len[bn][0])
        for p in range(h):
            for i in range(ks):
                for j in range(max(0, i - maskn), min(ks - 1, i + maskn) + 1):
                    M[bn][p][i][j] = L[maskn - (i - j)]
    scores = scores * M
    e = np.exp(scores - scores.max(-1, keepdims=True))
    p_attn = e / e.sum(-1, keepdims=True)
    x = p_attn @ v
    x = x.transpose(0, 2, 1, 3).reshape(B, S, h * d_k)
    return lin(x, mha.ws[3], mha.bs[3])


if __name__ == "__main__":
    B, S, d_model, h, Ln = 2, 8, 32, 4, 5

    root = jax.random.PRNGKey(0)
    root, kq, kk, kv, kp = jax.random.split(root, 5)
    q_in = jax.random.normal(kq, (B, S, d_model), jnp.float32)
    k_in = jax.random.normal(kk, (B, S, d_model), jnp.float32)
    v_in = jax.random.normal(kv, (B, S, d_model), jnp.float32)
    mask = jnp.asarray(
        [[[1, 1, 1, 1, 1, 1, 1, 1]],
         [[1, 1, 1, 1, 1, 1, 0, 0]]], dtype=jnp.int32)   # (B, 1, S)

    mha = MultiHeadedAttentionPallas(h, d_model, Ln, kp)

    out = mha(q_in, k_in, v_in, mask)
    out = jax.block_until_ready(out)

    ref = reference_forward(np.asarray(q_in), np.asarray(k_in),
                            np.asarray(v_in), np.asarray(mask), mha)
    # tolerance allows the EUP approximate reciprocal in the softmax normalizer
    np.testing.assert_allclose(np.asarray(out), ref, rtol=2e-3, atol=2e-3)
    print("KERNEL_OK")
</pallas_src>

<mosaic_0001>
module attributes {stable_mosaic.version = 11 : i64} {
  func.func @_qkv_proj_kernel(%arg0: i32, %arg1: memref<16x32xf32, #tpu.memory_space<vmem>>, %arg2: memref<16x32xf32, #tpu.memory_space<vmem>>, %arg3: memref<16x32xf32, #tpu.memory_space<vmem>>, %arg4: memref<32x32xf32, #tpu.memory_space<vmem>>, %arg5: memref<32x32xf32, #tpu.memory_space<vmem>>, %arg6: memref<32x32xf32, #tpu.memory_space<vmem>>, %arg7: memref<1x96xf32, #tpu.memory_space<vmem>>, %arg8: memref<16x96xf32, #tpu.memory_space<vmem>>) attributes {dimension_semantics = [#tpu.dimension_semantics<parallel>], iteration_bounds = array<i64: 1>, scalar_prefetch = 0 : i64, scratch_operands = 0 : i64, tpu.core_type = #tpu.core_type<tc>, window_params = [{transform_indices = @transform_0, window_bounds = array<i64: 16, 32>}, {transform_indices = @transform_1, window_bounds = array<i64: 16, 32>}, {transform_indices = @transform_2, window_bounds = array<i64: 16, 32>}, {pipeline_mode = #tpu.pipeline_mode<synchronous>, transform_indices = @transform_3, window_bounds = array<i64: 32, 32>}, {pipeline_mode = #tpu.pipeline_mode<synchronous>, transform_indices = @transform_4, window_bounds = array<i64: 32, 32>}, {pipeline_mode = #tpu.pipeline_mode<synchronous>, transform_indices = @transform_5, window_bounds = array<i64: 32, 32>}, {pipeline_mode = #tpu.pipeline_mode<synchronous>, transform_indices = @transform_6, window_bounds = array<i64: 1, 96>}, {transform_indices = @transform_7, window_bounds = array<i64: 16, 96>}]} {
    %c0 = arith.constant 0 : index
    %c0_0 = arith.constant 0 : index
    %0 = vector.load %arg1[%c0, %c0_0] : memref<16x32xf32, #tpu.memory_space<vmem>>, vector<16x32xf32>
    %c0_1 = arith.constant 0 : index
    %c0_2 = arith.constant 0 : index
    %1 = vector.load %arg4[%c0_1, %c0_2] : memref<32x32xf32, #tpu.memory_space<vmem>>, vector<32x32xf32>
    %cst = arith.constant dense<0.000000e+00> : vector<16x32xf32>
    %2 = tpu.matmul %0, %1, %cst {dimension_numbers = #tpu.dot_dimension_numbers<[1], [0], [0], [1], [0, 0, 1, 1], [], []>} : vector<16x32xf32>, vector<32x32xf32>, vector<16x32xf32> -> vector<16x32xf32>
    %c0_3 = arith.constant 0 : index
    %c0_4 = arith.constant 0 : index
    %3 = vector.load %arg2[%c0_3, %c0_4] : memref<16x32xf32, #tpu.memory_space<vmem>>, vector<16x32xf32>
    %c0_5 = arith.constant 0 : index
    %c0_6 = arith.constant 0 : index
    %4 = vector.load %arg5[%c0_5, %c0_6] : memref<32x32xf32, #tpu.memory_space<vmem>>, vector<32x32xf32>
    %cst_7 = arith.constant dense<0.000000e+00> : vector<16x32xf32>
    %5 = tpu.matmul %3, %4, %cst_7 {dimension_numbers = #tpu.dot_dimension_numbers<[1], [0], [0], [1], [0, 0, 1, 1], [], []>} : vector<16x32xf32>, vector<32x32xf32>, vector<16x32xf32> -> vector<16x32xf32>
    %c0_8 = arith.constant 0 : index
    %c0_9 = arith.constant 0 : index
    %6 = vector.load %arg3[%c0_8, %c0_9] : memref<16x32xf32, #tpu.memory_space<vmem>>, vector<16x32xf32>
    %c0_10 = arith.constant 0 : index
    %c0_11 = arith.constant 0 : index
    %7 = vector.load %arg6[%c0_10, %c0_11] : memref<32x32xf32, #tpu.memory_space<vmem>>, vector<32x32xf32>
    %cst_12 = arith.constant dense<0.000000e+00> : vector<16x32xf32>
    %8 = tpu.matmul %6, %7, %cst_12 {dimension_numbers = #tpu.dot_dimension_numbers<[1], [0], [0], [1], [0, 0, 1, 1], [], []>} : vector<16x32xf32>, vector<32x32xf32>, vector<16x32xf32> -> vector<16x32xf32>
    %9 = tpu.concatenate %2, %5, %8 in 1 : vector<16x32xf32>, vector<16x32xf32>, vector<16x32xf32> -> vector<16x96xf32>
    %c0_13 = arith.constant 0 : index
    %c0_14 = arith.constant 0 : index
    %10 = vector.load %arg7[%c0_13, %c0_14] : memref<1x96xf32, #tpu.memory_space<vmem>>, vector<1x96xf32>
    %11 = vector.broadcast %10 : vector<1x96xf32> to vector<16x96xf32>
    %12 = arith.addf %9, %11 : vector<16x96xf32>
    %c0_15 = arith.constant 0 : index
    %c0_16 = arith.constant 0 : index
    %13 = vector.load %arg8[%c0_15, %c0_16] : memref<16x96xf32, #tpu.memory_space<vmem>>, vector<16x96xf32>
    tpu.vector_store %arg8[%c0_15, %c0_16], %12 {strides = array<i32>} : memref<16x96xf32, #tpu.memory_space<vmem>>, vector<16x96xf32>,
    return
  }
  func.func @transform_0(%arg0: i32) -> (i32, i32) {
    %c0_i32 = arith.constant 0 : i32
    %c0_i32_0 = arith.constant 0 : i32
    return %arg0, %c0_i32 : i32, i32
  }
  func.func @transform_1(%arg0: i32) -> (i32, i32) {
    %c0_i32 = arith.constant 0 : i32
    %c0_i32_0 = arith.constant 0 : i32
    return %arg0, %c0_i32 : i32, i32
  }
  func.func @transform_2(%arg0: i32) -> (i32, i32) {
    %c0_i32 = arith.constant 0 : i32
    %c0_i32_0 = arith.constant 0 : i32
    return %arg0, %c0_i32 : i32, i32
  }
  func.func @transform_3(%arg0: i32) -> (i32, i32) {
    %c0_i32 = arith.constant 0 : i32
    %c0_i32_0 = arith.constant 0 : i32
    %c0_i32_1 = arith.constant 0 : i32
    return %c0_i32, %c0_i32_0 : i32, i32
  }
  func.func @transform_4(%arg0: i32) -> (i32, i32) {
    %c0_i32 = arith.constant 0 : i32
    %c0_i32_0 = arith.constant 0 : i32
    %c0_i32_1 = arith.constant 0 : i32
    return %c0_i32, %c0_i32_0 : i32, i32
  }
  func.func @transform_5(%arg0: i32) -> (i32, i32) {
    %c0_i32 = arith.constant 0 : i32
    %c0_i32_0 = arith.constant 0 : i32
    %c0_i32_1 = arith.constant 0 : i32
    return %c0_i32, %c0_i32_0 : i32, i32
  }
  func.func @transform_6(%arg0: i32) -> (i32, i32) {
    %c0_i32 = arith.constant 0 : i32
    %c0_i32_0 = arith.constant 0 : i32
    %c0_i32_1 = arith.constant 0 : i32
    return %c0_i32, %c0_i32_0 : i32, i32
  }
  func.func @transform_7(%arg0: i32) -> (i32, i32) {
    %c0_i32 = arith.constant 0 : i32
    %c0_i32_0 = arith.constant 0 : i32
    return %arg0, %c0_i32 : i32, i32
  }
}

</mosaic_0001>

<llo_original>
// kernel: tpu_custom_call.1
$region0: #{tpu_custom_call.1}
  #allocation0 [shape = 'u32[]', space=smem, size = 0x4, offset = 0x4, fixed_abs, tag = 'smem constant byte address 0x4 - core index']
  #allocation1 [shape = 'u32[144,128]{1,0:T(1,128)}', space=vmem, size = 0x12000, scoped, tag = 'internal scratch']
  %s0 = inlined_call_operand.hbm [shape: f32[16,32], index: 0, kind: input, shape index: {}]
  %s1 = inlined_call_operand.hbm [shape: f32[16,32], index: 1, kind: input, shape index: {}]
  %s2 = inlined_call_operand.hbm [shape: f32[16,32], index: 2, kind: input, shape index: {}]
  %s3 = inlined_call_operand.hbm [shape: f32[32,32], index: 3, kind: input, shape index: {}]
  %s4 = inlined_call_operand.hbm [shape: f32[32,32], index: 4, kind: input, shape index: {}]
  %s5 = inlined_call_operand.hbm [shape: f32[32,32], index: 5, kind: input, shape index: {}]
  %s6 = inlined_call_operand.vmem [shape: f32[1,96], index: 6, kind: input, shape index: {}]
  %s7 = inlined_call_operand.hbm [shape: f32[16,96], index: 7, kind: output, shape index: {}]
  %s8 = sld [smem:[#allocation0]]
  $region62: #{tpu_custom_call.1} parent=0
    _
  %s10 = ssub.s32 1, %s8
  %s11 = scalar_select 0, %s10, %s8
  $region1: #{tpu_custom_call.1} parent=0
    #allocation2 [shape = 'u8[8192]{0}', space=vmem, size = 0x2000, scoped, tag = 'input window, operand 0, single buffered']
    #allocation3 [shape = 's32[1]{0}', space=sflag, size = 0x4, scoped, tag = 'scoped memory for tpu_custom_call.1']
    #allocation4 [shape = 's32[1]{0}', space=sflag, size = 0x4, scoped, tag = 'scoped memory for tpu_custom_call.1']
    #allocation5 [shape = 'u8[8192]{0}', space=vmem, size = 0x2000, scoped, tag = 'input window, operand 1, single buffered']
    #allocation6 [shape = 's32[1]{0}', space=sflag, size = 0x4, scoped, tag = 'scoped memory for tpu_custom_call.1']
    #allocation7 [shape = 'u8[8192]{0}', space=vmem, size = 0x2000, scoped, tag = 'input window, operand 2, single buffered']
    #allocation8 [shape = 'u8[16384]{0}', space=vmem, size = 0x4000, scoped, tag = 'input window, operand 3, single buffered']
    #allocation9 [shape = 's32[1]{0}', space=sflag, size = 0x4, scoped, tag = 'scoped memory for tpu_custom_call.1']
    #allocation10 [shape = 'u8[16384]{0}', space=vmem, size = 0x4000, scoped, tag = 'input window, operand 4, single buffered']
    #allocation11 [shape = 'u8[16384]{0}', space=vmem, size = 0x4000, scoped, tag = 'input window, operand 5, single buffered']
    #allocation12 [shape = 's32[1]{0}', space=sflag, size = 0x4, scoped, tag = 'scoped memory for tpu_custom_call.1']
    #allocation13 [shape = 'u8[8192]{0}', space=vmem, size = 0x2000, scoped, tag = 'output window, operand 0, single buffered']
    %12 = vsyncpa [#allocation3], 0
    %13 = vsyncpa [#allocation6], 0
    %14 = vsyncpa [#allocation9], 0
    %15 = vsyncpa [#allocation12], 0
    %16 = vsyncpa [#allocation4], 0
    // Predicated region
    $region2: #{tpu_custom_call.1} parent=1 // pred_check
      _
    $region3: #{tpu_custom_call.1} parent=1 // pred_check_branch
      %18 = sbr.rel (0) target = $region5
    $region4: #{tpu_custom_call.1} parent=1 // pred_region
      %s20 = ssub.s32 256, 256
      %21 = vsyncadd [#allocation3], %s20
      %s22 = sshll.u32 [#allocation2], 4
      %s23 = int_to_ptr.vmem [resolvable:$true] %s22
      %28 = dma.hbm_to_vmem [thread:$0]  %s0, 256, %s23, [#allocation3], 128, 128, 8
    $region5: #{tpu_custom_call.1} parent=1 // pred_fallthru
      _
    // Predicated region
    $region6: #{tpu_custom_call.1} parent=1 // pred_check
      _
    $region7: #{tpu_custom_call.1} parent=1 // pred_check_branch
      %30 = sbr.rel (0) target = $region9
    $region8: #{tpu_custom_call.1} parent=1 // pred_region
      %s32 = ssub.s32 256, 256
      %33 = vsyncadd [#allocation6], %s32
      %s34 = sshll.u32 [#allocation5], 4
      %s35 = int_to_ptr.vmem [resolvable:$true] %s34
      %40 = dma.hbm_to_vmem [thread:$0]  %s1, 256, %s35, [#allocation6], 128, 128, 8
    $region9: #{tpu_custom_call.1} parent=1 // pred_fallthru
      _
    // Predicated region
    $region10: #{tpu_custom_call.1} parent=1 // pred_check
      _
    $region11: #{tpu_custom_call.1} parent=1 // pred_check_branch
      %42 = sbr.rel (0) target = $region13
    $region12: #{tpu_custom_call.1} parent=1 // pred_region
      %s44 = ssub.s32 256, 256
      %45 = vsyncadd [#allocation6], %s44
      %s46 = sshll.u32 [#allocation7], 4
      %s47 = int_to_ptr.vmem [resolvable:$true] %s46
      %52 = dma.hbm_to_vmem [thread:$0]  %s2, 256, %s47, [#allocation6], 128, 128, 8
    $region13: #{tpu_custom_call.1} parent=1 // pred_fallthru
      _
    // Predicated region
    $region14: #{tpu_custom_call.1} parent=1 // pred_check
      _
    $region15: #{tpu_custom_call.1} parent=1 // pred_check_branch
      %54 = sbr.rel (0) target = $region17
    $region16: #{tpu_custom_call.1} parent=1 // pred_region
      %s56 = ssub.s32 512, 512
      %57 = vsyncadd [#allocation9], %s56
      %s58 = sshll.u32 [#allocation8], 4
      %s59 = int_to_ptr.vmem [resolvable:$true] %s58
      %64 = dma.hbm_to_vmem [thread:$0]  %s3, 512, %s59, [#allocation9], 128, 128, 8
    $region17: #{tpu_custom_call.1} parent=1 // pred_fallthru
      _
    // Predicated region
    $region18: #{tpu_custom_call.1} parent=1 // pred_check
      _
    $region19: #{tpu_custom_call.1} parent=1 // pred_check_branch
      %66 = sbr.rel (0) target = $region21
    $region20: #{tpu_custom_call.1} parent=1 // pred_region
      %s68 = ssub.s32 512, 512
      %69 = vsyncadd [#allocation9], %s68
      %s70 = sshll.u32 [#allocation10], 4
      %s71 = int_to_ptr.vmem [resolvable:$true] %s70
      %76 = dma.hbm_to_vmem [thread:$0]  %s4, 512, %s71, [#allocation9], 128, 128, 8
    $region21: #{tpu_custom_call.1} parent=1 // pred_fallthru
      _
    // Predicated region
    $region22: #{tpu_custom_call.1} parent=1 // pred_check
      _
    $region23: #{tpu_custom_call.1} parent=1 // pred_check_branch
      %78 = sbr.rel (0) target = $region25
    $region24: #{tpu_custom_call.1} parent=1 // pred_region
      %s80 = ssub.s32 512, 512
      %81 = vsyncadd [#allocation12], %s80
      %s82 = sshll.u32 [#allocation11], 4
      %s83 = int_to_ptr.vmem [resolvable:$true] %s82
      %88 = dma.hbm_to_vmem [thread:$0]  %s5, 512, %s83, [#allocation12], 128, 128, 8
    $region25: #{tpu_custom_call.1} parent=1 // pred_fallthru
      _
    // Predicated region
    $region26: #{tpu_custom_call.1} parent=1 // pred_check
      _
    $region27: #{tpu_custom_call.1} parent=1 // pred_check_branch
      %90 = sbr.rel (0) target = $region29
    $region28: #{tpu_custom_call.1} parent=1 // pred_region
      _
    $region29: #{tpu_custom_call.1} parent=1 // pred_fallthru
      _
    // Predicated region
    $region30: #{tpu_custom_call.1} parent=1 // pred_check
      _
    $region31: #{tpu_custom_call.1} parent=1 // pred_check_branch
      %92 = sbr.rel (0) target = $region33
    $region32: #{tpu_custom_call.1} parent=1 // pred_region
      %93 = dma.done [#allocation3], 256
    $region33: #{tpu_custom_call.1} parent=1 // pred_fallthru
      _
    // Predicated region
    $region34: #{tpu_custom_call.1} parent=1 // pred_check
      _
    $region35: #{tpu_custom_call.1} parent=1 // pred_check_branch
      %95 = sbr.rel (0) target = $region37
    $region36: #{tpu_custom_call.1} parent=1 // pred_region
      %96 = dma.done [#allocation6], 256
    $region37: #{tpu_custom_call.1} parent=1 // pred_fallthru
      _
    // Predicated region
    $region38: #{tpu_custom_call.1} parent=1 // pred_check
      _
    $region39: #{tpu_custom_call.1} parent=1 // pred_check_branch
      %98 = sbr.rel (0) target = $region41
    $region40: #{tpu_custom_call.1} parent=1 // pred_region
      %99 = dma.done [#allocation6], 256
    $region41: #{tpu_custom_call.1} parent=1 // pred_fallthru
      _
    // Predicated region
    $region42: #{tpu_custom_call.1} parent=1 // pred_check
      _
    $region43: #{tpu_custom_call.1} parent=1 // pred_check_branch
      %101 = sbr.rel (0) target = $region45
    $region44: #{tpu_custom_call.1} parent=1 // pred_region
      %102 = dma.done [#allocation9], 512
    $region45: #{tpu_custom_call.1} parent=1 // pred_fallthru
      _
    // Predicated region
    $region46: #{tpu_custom_call.1} parent=1 // pred_check
      _
    $region47: #{tpu_custom_call.1} parent=1 // pred_check_branch
      %104 = sbr.rel (0) target = $region49
    $region48: #{tpu_custom_call.1} parent=1 // pred_region
      %105 = dma.done [#allocation9], 512
    $region49: #{tpu_custom_call.1} parent=1 // pred_fallthru
      _
    // Predicated region
    $region50: #{tpu_custom_call.1} parent=1 // pred_check
      _
    $region51: #{tpu_custom_call.1} parent=1 // pred_check_branch
      %107 = sbr.rel (0) target = $region53
    $region52: #{tpu_custom_call.1} parent=1 // pred_region
      %108 = dma.done [#allocation12], 512
    $region53: #{tpu_custom_call.1} parent=1 // pred_fallthru
      _
    %v109 = vld [vmem:[#allocation2] sm:$0xff]
    %v110 = vld [vmem:[#allocation2 + $0x8] sm:$0xff]
    %v111 = vld [vmem:[#allocation8] sm:$0xff]
    %v112 = vld [vmem:[#allocation8 + $0x8] sm:$0xff]
    %v113 = vld [vmem:[#allocation8 + $0x10] sm:$0xff]
    %v114 = vld [vmem:[#allocation8 + $0x18] sm:$0xff]
    %vm115 = vcmask 261120
    %v117 = vsel %vm115, %v109, 0
    %v120 = vsel %vm115, %v110, 0
    %122 = vmatprep.subr.mxu0 0.0
    %123 = vmatpush1.msra.mxu0 0.0
    %124 = vmatprep.subr.mxu0 0.0
    %125 = vmatpush1.msra.mxu0 0.0
    %126 = vmatprep.subr.mxu0 0.0
    %127 = vmatpush1.msra.mxu0 0.0
    %128 = vmatprep.subr.mxu0 0.0
    %129 = vmatpush1.msra.mxu0 0.0
    %130 = vmatprep.subr.mxu0 0.0
    %131 = vmatpush1.msra.mxu0 0.0
    %132 = vmatprep.subr.mxu0 0.0
    %133 = vmatpush1.msra.mxu0 0.0
    %134 = vmatprep.subr.mxu0 0.0
    %135 = vmatpush1.msra.mxu0 0.0
    %136 = vmatprep.subr.mxu0 0.0
    %137 = vmatpush1.msra.mxu0 0.0
    %138 = vmatprep.subr.mxu0 0.0
    %139 = vmatpush1.msra.mxu0 0.0
    %140 = vmatprep.subr.mxu0 0.0
    %141 = vmatpush1.msra.mxu0 0.0
    %142 = vmatprep.subr.mxu0 0.0
    %143 = vmatpush1.msra.mxu0 0.0
    %144 = vmatprep.subr.mxu0 0.0
    %145 = vmatpush1.msra.mxu0 0.0
    %146 = vmatprep.subr.mxu0 0.0
    %147 = vmatpush1.msra.mxu0 %v114
    %148 = vmatprep.subr.mxu0 0.0
    %149 = vmatpush1.msra.mxu0 %v113
    %150 = vmatprep.subr.mxu0 0.0
    %151 = vmatpush1.msra.mxu0 %v112
    %152 = vmatprep.subr.mxu0 0.0
    %153 = vmatpush1.msra.mxu0 %v111
    %154 = vmatprep.subr.mxu0 0.0
    %155 = vmatpush2.msra.mxu0 0.0
    %156 = vmatprep.subr.mxu0 0.0
    %157 = vmatpush2.msra.mxu0 0.0
    %158 = vmatprep.subr.mxu0 0.0
    %159 = vmatpush2.msra.mxu0 0.0
    %160 = vmatprep.subr.mxu0 0.0
    %161 = vmatpush2.msra.mxu0 0.0
    %162 = vmatprep.subr.mxu0 0.0
    %163 = vmatpush2.msra.mxu0 0.0
    %164 = vmatprep.subr.mxu0 0.0
    %165 = vmatpush2.msra.mxu0 0.0
    %166 = vmatprep.subr.mxu0 0.0
    %167 = vmatpush2.msra.mxu0 0.0
    %168 = vmatprep.subr.mxu0 0.0
    %169 = vmatpush2.msra.mxu0 0.0
    %170 = vmatprep.subr.mxu0 0.0
    %171 = vmatpush2.msra.mxu0 0.0
    %172 = vmatprep.subr.mxu0 0.0
    %173 = vmatpush2.msra.mxu0 0.0
    %174 = vmatprep.subr.mxu0 0.0
    %175 = vmatpush2.msra.mxu0 0.0
    %176 = vmatprep.subr.mxu0 0.0
    %177 = vmatpush2.msra.mxu0 0.0
    %178 = vmatprep.subr.mxu0 0.0
    %179 = vmatpush2.msra.mxu0 0.0
    %180 = vmatprep.subr.mxu0 0.0
    %181 = vmatpush2.msra.mxu0 0.0
    %182 = vmatprep.subr.mxu0 0.0
    %183 = vmatpush2.msra.mxu0 0.0
    %184 = vmatprep.subr.mxu0 0.0
    %185 = vmatpush2.msra.mxu0 0.0
    %186 = vmatprep.mubr.f32.mxu0 0.0
    %187 = vmatmul.mubr.f32.gmra.mxu0 %v117
    %v188 = vpop.f32.mrf.mxu0
    %v189 = vadd.f32 0.0, %v188
    %v190 = vpop.f32.mrf.mxu0
    %191 = vmatprep.mubr.f32.mxu0 0.0
    %192 = vmatmul.mubr.f32.gmra.mxu0 %v120
    %v193 = vpop.f32.mrf.mxu0
    %v194 = vadd.f32 0.0, %v193
    %v195 = vpop.f32.mrf.mxu0
    %196 = vdwg.mxu0
    %v197 = vld [vmem:[#allocation5] sm:$0xff]
    %v198 = vld [vmem:[#allocation5 + $0x8] sm:$0xff]
    %v199 = vld [vmem:[#allocation10] sm:$0xff]
    %v200 = vld [vmem:[#allocation10 + $0x8] sm:$0xff]
    %v201 = vld [vmem:[#allocation10 + $0x10] sm:$0xff]
    %v202 = vld [vmem:[#allocation10 + $0x18] sm:$0xff]
    %v204 = vsel %vm115, %v197, 0
    %v207 = vsel %vm115, %v198, 0
    %209 = vmatprep.subr.mxu0 0.0
    %210 = vmatpush1.msra.mxu0 0.0
    %211 = vmatprep.subr.mxu0 0.0
    %212 = vmatpush1.msra.mxu0 0.0
    %213 = vmatprep.subr.mxu0 0.0
    %214 = vmatpush1.msra.mxu0 0.0
    %215 = vmatprep.subr.mxu0 0.0
    %216 = vmatpush1.msra.mxu0 0.0
    %217 = vmatprep.subr.mxu0 0.0
    %218 = vmatpush1.msra.mxu0 0.0
    %219 = vmatprep.subr.mxu0 0.0
    %220 = vmatpush1.msra.mxu0 0.0
    %221 = vmatprep.subr.mxu0 0.0
    %222 = vmatpush1.msra.mxu0 0.0
    %223 = vmatprep.subr.mxu0 0.0
    %224 = vmatpush1.msra.mxu0 0.0
    %225 = vmatprep.subr.mxu0 0.0
    %226 = vmatpush1.msra.mxu0 0.0
    %227 = vmatprep.subr.mxu0 0.0
    %228 = vmatpush1.msra.mxu0 0.0
    %229 = vmatprep.subr.mxu0 0.0
    %230 = vmatpush1.msra.mxu0 0.0
    %231 = vmatprep.subr.mxu0 0.0
    %232 = vmatpush1.msra.mxu0 0.0
    %233 = vmatprep.subr.mxu0 0.0
    %234 = vmatpush1.msra.mxu0 %v202
    %235 = vmatprep.subr.mxu0 0.0
    %236 = vmatpush1.msra.mxu0 %v201
    %237 = vmatprep.subr.mxu0 0.0
    %238 = vmatpush1.msra.mxu0 %v200
    %239 = vmatprep.subr.mxu0 0.0
    %240 = vmatpush1.msra.mxu0 %v199
    %241 = vmatprep.subr.mxu0 0.0
    %242 = vmatpush2.msra.mxu0 0.0
    %243 = vmatprep.subr.mxu0 0.0
    %244 = vmatpush2.msra.mxu0 0.0
    %245 = vmatprep.subr.mxu0 0.0
    %246 = vmatpush2.msra.mxu0 0.0
    %247 = vmatprep.subr.mxu0 0.0
    %248 = vmatpush2.msra.mxu0 0.0
    %249 = vmatprep.subr.mxu0 0.0
    %250 = vmatpush2.msra.mxu0 0.0
    %251 = vmatprep.subr.mxu0 0.0
    %252 = vmatpush2.msra.mxu0 0.0
    %253 = vmatprep.subr.mxu0 0.0
    %254 = vmatpush2.msra.mxu0 0.0
    %255 = vmatprep.subr.mxu0 0.0
    %256 = vmatpush2.msra.mxu0 0.0
    %257 = vmatprep.subr.mxu0 0.0
    %258 = vmatpush2.msra.mxu0 0.0
    %259 = vmatprep.subr.mxu0 0.0
    %260 = vmatpush2.msra.mxu0 0.0
    %261 = vmatprep.subr.mxu0 0.0
    %262 = vmatpush2.msra.mxu0 0.0
    %263 = vmatprep.subr.mxu0 0.0
    %264 = vmatpush2.msra.mxu0 0.0
    %265 = vmatprep.subr.mxu0 0.0
    %266 = vmatpush2.msra.mxu0 0.0
    %267 = vmatprep.subr.mxu0 0.0
    %268 = vmatpush2.msra.mxu0 0.0
    %269 = vmatprep.subr.mxu0 0.0
    %270 = vmatpush2.msra.mxu0 0.0
    %271 = vmatprep.subr.mxu0 0.0
    %272 = vmatpush2.msra.mxu0 0.0
    %273 = vmatprep.mubr.f32.mxu0 0.0
    %274 = vmatmul.mubr.f32.gmra.mxu0 %v204
    %v275 = vpop.f32.mrf.mxu0
    %v276 = vadd.f32 0.0, %v275
    %v277 = vpop.f32.mrf.mxu0
    %278 = vmatprep.mubr.f32.mxu0 0.0
    %279 = vmatmul.mubr.f32.gmra.mxu0 %v207
    %v280 = vpop.f32.mrf.mxu0
    %v281 = vadd.f32 0.0, %v280
    %v282 = vpop.f32.mrf.mxu0
    %283 = vdwg.mxu0
    %v284 = vld [vmem:[#allocation7] sm:$0xff]
    %v285 = vld [vmem:[#allocation7 + $0x8] sm:$0xff]
    %v286 = vld [vmem:[#allocation11] sm:$0xff]
    %v287 = vld [vmem:[#allocation11 + $0x8] sm:$0xff]
    %v288 = vld [vmem:[#allocation11 + $0x10] sm:$0xff]
    %v289 = vld [vmem:[#allocation11 + $0x18] sm:$0xff]
    %v291 = vsel %vm115, %v284, 0
    %v294 = vsel %vm115, %v285, 0
    %296 = vmatprep.subr.mxu0 0.0
    %297 = vmatpush1.msra.mxu0 0.0
    %298 = vmatprep.subr.mxu0 0.0
    %299 = vmatpush1.msra.mxu0 0.0
    %300 = vmatprep.subr.mxu0 0.0
    %301 = vmatpush1.msra.mxu0 0.0
    %302 = vmatprep.subr.mxu0 0.0
    %303 = vmatpush1.msra.mxu0 0.0
    %304 = vmatprep.subr.mxu0 0.0
    %305 = vmatpush1.msra.mxu0 0.0
    %306 = vmatprep.subr.mxu0 0.0
    %307 = vmatpush1.msra.mxu0 0.0
    %308 = vmatprep.subr.mxu0 0.0
    %309 = vmatpush1.msra.mxu0 0.0
    %310 = vmatprep.subr.mxu0 0.0
    %311 = vmatpush1.msra.mxu0 0.0
    %312 = vmatprep.subr.mxu0 0.0
    %313 = vmatpush1.msra.mxu0 0.0
    %314 = vmatprep.subr.mxu0 0.0
    %315 = vmatpush1.msra.mxu0 0.0
    %316 = vmatprep.subr.mxu0 0.0
    %317 = vmatpush1.msra.mxu0 0.0
    %318 = vmatprep.subr.mxu0 0.0
    %319 = vmatpush1.msra.mxu0 0.0
    %320 = vmatprep.subr.mxu0 0.0
    %321 = vmatpush1.msra.mxu0 %v289
    %322 = vmatprep.subr.mxu0 0.0
    %323 = vmatpush1.msra.mxu0 %v288
    %324 = vmatprep.subr.mxu0 0.0
    %325 = vmatpush1.msra.mxu0 %v287
    %326 = vmatprep.subr.mxu0 0.0
    %327 = vmatpush1.msra.mxu0 %v286
    %328 = vmatprep.subr.mxu0 0.0
    %329 = vmatpush2.msra.mxu0 0.0
    %330 = vmatprep.subr.mxu0 0.0
    %331 = vmatpush2.msra.mxu0 0.0
    %332 = vmatprep.subr.mxu0 0.0
    %333 = vmatpush2.msra.mxu0 0.0
    %334 = vmatprep.subr.mxu0 0.0
    %335 = vmatpush2.msra.mxu0 0.0
    %336 = vmatprep.subr.mxu0 0.0
    %337 = vmatpush2.msra.mxu0 0.0
    %338 = vmatprep.subr.mxu0 0.0
    %339 = vmatpush2.msra.mxu0 0.0
    %340 = vmatprep.subr.mxu0 0.0
    %341 = vmatpush2.msra.mxu0 0.0
    %342 = vmatprep.subr.mxu0 0.0
    %343 = vmatpush2.msra.mxu0 0.0
    %344 = vmatprep.subr.mxu0 0.0
    %345 = vmatpush2.msra.mxu0 0.0
    %346 = vmatprep.subr.mxu0 0.0
    %347 = vmatpush2.msra.mxu0 0.0
    %348 = vmatprep.subr.mxu0 0.0
    %349 = vmatpush2.msra.mxu0 0.0
    %350 = vmatprep.subr.mxu0 0.0
    %351 = vmatpush2.msra.mxu0 0.0
    %352 = vmatprep.subr.mxu0 0.0
    %353 = vmatpush2.msra.mxu0 0.0
    %354 = vmatprep.subr.mxu0 0.0
    %355 = vmatpush2.msra.mxu0 0.0
    %356 = vmatprep.subr.mxu0 0.0
    %357 = vmatpush2.msra.mxu0 0.0
    %358 = vmatprep.subr.mxu0 0.0
    %359 = vmatpush2.msra.mxu0 0.0
    %360 = vmatprep.mubr.f32.mxu0 0.0
    %361 = vmatmul.mubr.f32.gmra.mxu0 %v291
    %v362 = vpop.f32.mrf.mxu0
    %v363 = vadd.f32 0.0, %v362
    %v364 = vpop.f32.mrf.mxu0
    %365 = vmatprep.mubr.f32.mxu0 0.0
    %366 = vmatmul.mubr.f32.gmra.mxu0 %v294
    %v367 = vpop.f32.mrf.mxu0
    %v368 = vadd.f32 0.0, %v367
    %v369 = vpop.f32.mrf.mxu0
    %370 = vdwg.mxu0
    %373 = vrot.lane.b32.xlu0 %v276, 32
    %v374 = vpop.permute.xlu0 %373
    %375 = vrot.lane.b32.xlu0 %v281, 32
    %v376 = vpop.permute.xlu0 %375
    %381 = vrot.lane.b32.xlu0 %v363, 64
    %v382 = vpop.permute.xlu0 %381
    %383 = vrot.lane.b32.xlu0 %v368, 64
    %v384 = vpop.permute.xlu0 %383
    %v387 = vsel %vm115, %v189, %v374
    %v388 = vsel %vm115, %v194, %v376
    %vm389 = vcmask 523264
    %v390 = vsel %vm389, %v387, %v382
    %v391 = vsel %vm389, %v388, %v384
    %v392 = vld [vmem:[%s6] sm:$0x1]
    %v394 = vlaneseq
    %v395 = vshrl.u32 %v394, 7
    %v396 = vsub.s32 0, %v395
    %v397 = vrot.slane %v392, %v396
    %v399 = vadd.f32 %v390, %v397
    %v400 = vadd.f32 %v391, %v397
    %vm401 = vcmask 785408
    %402 = vst.msk [vmem:[#allocation13] sm:$0xff] %vm401, %v399
    %403 = vst.msk [vmem:[#allocation13 + $0x8] sm:$0xff] %vm401, %v400
    // Predicated region
    $region54: #{tpu_custom_call.1} parent=1 // pred_check
      _
    $region55: #{tpu_custom_call.1} parent=1 // pred_check_branch
      %405 = sbr.rel (0) target = $region57
    $region56: #{tpu_custom_call.1} parent=1 // pred_region
      %s407 = ssub.s32 256, 256
      %408 = vsyncadd [#allocation4], %s407
      %s409 = sshll.u32 [#allocation13], 4
      %s410 = int_to_ptr.vmem [resolvable:$true] %s409
      %415 = dma.vmem_to_hbm [thread:$0]  %s410, 256, %s7, [#allocation4], 128, 128, 8
    $region57: #{tpu_custom_call.1} parent=1 // pred_fallthru
      _
    // Predicated region
    $region58: #{tpu_custom_call.1} parent=1 // pred_check
      _
    $region59: #{tpu_custom_call.1} parent=1 // pred_check_branch
      %417 = sbr.rel (0) target = $region61
    $region60: #{tpu_custom_call.1} parent=1 // pred_region
      %418 = dma.done [#allocation4], 256
    $region61: #{tpu_custom_call.1} parent=1 // pred_fallthru
      _
    %419 = vsyncpa [#allocation3], 1
    %420 = vsyncpa [#allocation6], 1
    %421 = vsyncpa [#allocation9], 1
    %422 = vsyncpa [#allocation12], 1
    %423 = vsyncpa [#allocation4], 1

</llo_original>
